<compile_context>
chip_gen: v5e
topology: v5e:2x2
jax: 0.10.0
libtpu: 0.0.40
codegen_flags: <defaults>
</compile_context>

<pallas_src>
import jax
import jax.numpy as jnp
from jax.experimental import pallas as pl
from jax.experimental.pallas import tpu as pltpu

IN_FEATURES = 10
HIDDEN = 64
NUM_CLASSES = 4
MAX_TILE_B = 8192  # per-step batch tile upper bound (step-overhead amortization)


def _round_up(x: int, m: int) -> int:
    return (x + m - 1) // m * m


def _cdiv(a: int, b: int) -> int:
    return (a + b - 1) // b


def mlp_kernel(x_ref, w1_ref, b1_ref, w2_ref, b2_ref, o_ref):
    # x arrives in f32 (single HBM pass); cast to bf16 on the VPU for the MXU dot.
    x_bf = x_ref[...].astype(jnp.bfloat16)
    # fc1: (TILE_B, 10) bf16 @ (10, 64) bf16 -> f32 accumulate
    h = jnp.dot(x_bf, w1_ref[...], preferred_element_type=jnp.float32)
    # bias + ReLU in f32 (v5e-friendly, accuracy-preserving)
    h = jnp.maximum(h + b1_ref[...], 0.0)
    # fc2: (TILE_B, 64) bf16 @ (64, num_classes) bf16 -> f32 accumulate
    out = jnp.dot(h.astype(jnp.bfloat16), w2_ref[...],
                  preferred_element_type=jnp.float32)
    # narrow (TILE_B, num_classes) f32 store — only real logit bytes hit HBM
    o_ref[...] = (out + b2_ref[...]).astype(o_ref.dtype)


def _choose_tile_b(B: int, max_tile_b: int = MAX_TILE_B) -> int:
    """Tile multiple of 8, >=2 grid steps when B allows (v7x 2-TC sharding),
    capped at max_tile_b, and sized relative to B to bound padding waste."""
    b8 = _round_up(max(B, 8), 8)
    if b8 <= 16:
        return b8  # too small to split usefully; single step
    n_steps = max(2, _cdiv(b8, max_tile_b))
    return _round_up(_cdiv(B, n_steps), 8)


def custom_model_forward(x, w1, b1, w2, b2, *, max_tile_b: int = MAX_TILE_B):
    """x: (B, *) — flattened to (B, 10) like torch.flatten(x, 1).

    w1: (10, 64), b1: (1, 64), w2: (64, num_classes), b2: (1, num_classes)
    (weights stored transposed vs. PyTorch's nn.Linear so we compute y = x @ W + b).
    """
    B = x.shape[0]
    x2d = x.reshape(B, -1).astype(jnp.float32)  # glue: flatten(start_dim=1)
    assert x2d.shape[1] == IN_FEATURES, (
        f"expected {IN_FEATURES} features, got {x2d.shape[1]}")
    num_classes = w2.shape[1]

    # --- batch tiling: multiple of 8, padding bounded, >=2 steps at large B ---
    tile_b = _choose_tile_b(B, max_tile_b)
    b_pad = _round_up(B, tile_b)
    if b_pad != B:
        x2d = jnp.pad(x2d, ((0, b_pad - B), (0, 0)))

    # --- one-time bf16 cast of the tiny weights (x stays f32; cast in-kernel) ---
    w1_bf = w1.astype(jnp.bfloat16)
    w2_bf = w2.astype(jnp.bfloat16)

    grid = (b_pad // tile_b,)

    out = pl.pallas_call(
        mlp_kernel,
        out_shape=jax.ShapeDtypeStruct((b_pad, num_classes), jnp.float32),
        grid=grid,
        in_specs=[
            # x: tiled over batch (f32, single HBM read)
            pl.BlockSpec((tile_b, IN_FEATURES), lambda i: (i, 0)),
            # weights / biases: constant index_map -> VMEM-resident across the grid
            pl.BlockSpec((IN_FEATURES, HIDDEN), lambda i: (0, 0)),
            pl.BlockSpec((1, HIDDEN), lambda i: (0, 0)),
            pl.BlockSpec((HIDDEN, num_classes), lambda i: (0, 0)),
            pl.BlockSpec((1, num_classes), lambda i: (0, 0)),
        ],
        # narrow output block: last dim == full array dim (legal), no lane padding
        out_specs=pl.BlockSpec((tile_b, num_classes), lambda i: (i, 0)),
        compiler_params=pltpu.CompilerParams(
            dimension_semantics=("parallel",),     # megacore sharding on v7x
            vmem_limit_bytes=48 * 1024 * 1024,     # safe on 64 MiB (v7x) parts
        ),
    )(x2d, w1_bf, b1, w2_bf, b2)

    # only the (cheap, bounded) batch-padding slice remains; class axis is exact
    return out if b_pad == B else out[:B]


def init_params(key, num_classes):
    """Deterministic init mimicking nn.Linear's U(-1/sqrt(fan_in), 1/sqrt(fan_in))."""
    k1, k2, k3, k4 = jax.random.split(key, 4)
    bound1 = 1.0 / jnp.sqrt(IN_FEATURES)
    bound2 = 1.0 / jnp.sqrt(HIDDEN)
    # Stored as (in, out): transpose of PyTorch's (out, in) weight layout.
    w1 = jax.random.uniform(k1, (IN_FEATURES, HIDDEN), jnp.float32, -bound1, bound1)
    b1 = jax.random.uniform(k2, (1, HIDDEN), jnp.float32, -bound1, bound1)
    w2 = jax.random.uniform(k3, (HIDDEN, num_classes), jnp.float32, -bound2, bound2)
    b2 = jax.random.uniform(k4, (1, num_classes), jnp.float32, -bound2, bound2)
    return w1, b1, w2, b2


if __name__ == "__main__":
    key = jax.random.PRNGKey(0)
    kx, kp = jax.random.split(key)

    # Small input: batch=8, features (2, 5) -> flatten to 10 (fc1's in_features).
    x = jax.random.normal(kx, (8, 2, 5), dtype=jnp.float32)
    w1, b1, w2, b2 = init_params(kp, NUM_CLASSES)

    out = custom_model_forward(x, w1, b1, w2, b2)
    jax.block_until_ready(out)
    assert out.shape == (8, NUM_CLASSES), out.shape

    # Reference check in plain JAX (f32). Tolerance accounts for bf16 MXU inputs.
    x2d = x.reshape(x.shape[0], -1)
    ref = jnp.maximum(x2d @ w1 + b1, 0.0) @ w2 + b2
    assert jnp.allclose(out, ref, atol=2e-2, rtol=2e-2), (
        f"max abs err {jnp.max(jnp.abs(out - ref))}")

    print("KERNEL_OK")
</pallas_src>

<mosaic_0001>
module attributes {stable_mosaic.version = 11 : i64} {
  func.func @mlp_kernel(%arg0: i32, %arg1: memref<8x10xf32, #tpu.memory_space<vmem>>, %arg2: memref<10x64xbf16, #tpu.memory_space<vmem>>, %arg3: memref<1x64xf32, #tpu.memory_space<vmem>>, %arg4: memref<64x4xbf16, #tpu.memory_space<vmem>>, %arg5: memref<1x4xf32, #tpu.memory_space<vmem>>, %arg6: memref<8x4xf32, #tpu.memory_space<vmem>>) attributes {dimension_semantics = [#tpu.dimension_semantics<parallel>], iteration_bounds = array<i64: 1>, scalar_prefetch = 0 : i64, scratch_operands = 0 : i64, tpu.core_type = #tpu.core_type<tc>, window_params = [{transform_indices = @transform_0, window_bounds = array<i64: 8, 10>}, {pipeline_mode = #tpu.pipeline_mode<synchronous>, transform_indices = @transform_1, window_bounds = array<i64: 10, 64>}, {pipeline_mode = #tpu.pipeline_mode<synchronous>, transform_indices = @transform_2, window_bounds = array<i64: 1, 64>}, {pipeline_mode = #tpu.pipeline_mode<synchronous>, transform_indices = @transform_3, window_bounds = array<i64: 64, 4>}, {pipeline_mode = #tpu.pipeline_mode<synchronous>, transform_indices = @transform_4, window_bounds = array<i64: 1, 4>}, {transform_indices = @transform_5, window_bounds = array<i64: 8, 4>}]} {
    %c0 = arith.constant 0 : index
    %c0_0 = arith.constant 0 : index
    %0 = vector.load %arg1[%c0, %c0_0] : memref<8x10xf32, #tpu.memory_space<vmem>>, vector<8x10xf32>
    %1 = arith.truncf %0 : vector<8x10xf32> to vector<8x10xbf16>
    %c0_1 = arith.constant 0 : index
    %c0_2 = arith.constant 0 : index
    %2 = vector.load %arg2[%c0_1, %c0_2] : memref<10x64xbf16, #tpu.memory_space<vmem>>, vector<10x64xbf16>
    %cst = arith.constant dense<0.000000e+00> : vector<8x64xf32>
    %3 = tpu.matmul %1, %2, %cst {dimension_numbers = #tpu.dot_dimension_numbers<[1], [0], [0], [1], [0, 0, 1, 1], [], []>} : vector<8x10xbf16>, vector<10x64xbf16>, vector<8x64xf32> -> vector<8x64xf32>
    %c0_3 = arith.constant 0 : index
    %c0_4 = arith.constant 0 : index
    %4 = vector.load %arg3[%c0_3, %c0_4] : memref<1x64xf32, #tpu.memory_space<vmem>>, vector<1x64xf32>
    %5 = vector.broadcast %4 : vector<1x64xf32> to vector<8x64xf32>
    %6 = arith.addf %3, %5 : vector<8x64xf32>
    %cst_5 = arith.constant 0.000000e+00 : f32
    %7 = vector.broadcast %cst_5 : f32 to vector<8x64xf32>
    %8 = arith.maximumf %6, %7 : vector<8x64xf32>
    %9 = arith.truncf %8 : vector<8x64xf32> to vector<8x64xbf16>
    %c0_6 = arith.constant 0 : index
    %c0_7 = arith.constant 0 : index
    %10 = vector.load %arg4[%c0_6, %c0_7] : memref<64x4xbf16, #tpu.memory_space<vmem>>, vector<64x4xbf16>
    %cst_8 = arith.constant dense<0.000000e+00> : vector<8x4xf32>
    %11 = tpu.matmul %9, %10, %cst_8 {dimension_numbers = #tpu.dot_dimension_numbers<[1], [0], [0], [1], [0, 0, 1, 1], [], []>} : vector<8x64xbf16>, vector<64x4xbf16>, vector<8x4xf32> -> vector<8x4xf32>
    %c0_9 = arith.constant 0 : index
    %c0_10 = arith.constant 0 : index
    %12 = vector.load %arg5[%c0_9, %c0_10] : memref<1x4xf32, #tpu.memory_space<vmem>>, vector<1x4xf32>
    %13 = vector.broadcast %12 : vector<1x4xf32> to vector<8x4xf32>
    %14 = arith.addf %11, %13 : vector<8x4xf32>
    %c0_11 = arith.constant 0 : index
    %c0_12 = arith.constant 0 : index
    %15 = vector.load %arg6[%c0_11, %c0_12] : memref<8x4xf32, #tpu.memory_space<vmem>>, vector<8x4xf32>
    tpu.vector_store %arg6[%c0_11, %c0_12], %14 {strides = array<i32>} : memref<8x4xf32, #tpu.memory_space<vmem>>, vector<8x4xf32>,
    return
  }
  func.func @transform_0(%arg0: i32) -> (i32, i32) {
    %c0_i32 = arith.constant 0 : i32
    %c0_i32_0 = arith.constant 0 : i32
    return %arg0, %c0_i32 : i32, i32
  }
  func.func @transform_1(%arg0: i32) -> (i32, i32) {
    %c0_i32 = arith.constant 0 : i32
    %c0_i32_0 = arith.constant 0 : i32
    %c0_i32_1 = arith.constant 0 : i32
    return %c0_i32, %c0_i32_0 : i32, i32
  }
  func.func @transform_2(%arg0: i32) -> (i32, i32) {
    %c0_i32 = arith.constant 0 : i32
    %c0_i32_0 = arith.constant 0 : i32
    %c0_i32_1 = arith.constant 0 : i32
    return %c0_i32, %c0_i32_0 : i32, i32
  }
  func.func @transform_3(%arg0: i32) -> (i32, i32) {
    %c0_i32 = arith.constant 0 : i32
    %c0_i32_0 = arith.constant 0 : i32
    %c0_i32_1 = arith.constant 0 : i32
    return %c0_i32, %c0_i32_0 : i32, i32
  }
  func.func @transform_4(%arg0: i32) -> (i32, i32) {
    %c0_i32 = arith.constant 0 : i32
    %c0_i32_0 = arith.constant 0 : i32
    %c0_i32_1 = arith.constant 0 : i32
    return %c0_i32, %c0_i32_0 : i32, i32
  }
  func.func @transform_5(%arg0: i32) -> (i32, i32) {
    %c0_i32 = arith.constant 0 : i32
    %c0_i32_0 = arith.constant 0 : i32
    return %arg0, %c0_i32 : i32, i32
  }
}

</mosaic_0001>

<llo_original>
// kernel: tpu_custom_call.1
$region0: #{tpu_custom_call.1}
  #allocation0 [shape = 'u32[]', space=smem, size = 0x4, offset = 0x4, fixed_abs, tag = 'smem constant byte address 0x4 - core index']
  #allocation1 [shape = 'u32[72,128]{1,0:T(1,128)}', space=vmem, size = 0x9000, scoped, tag = 'internal scratch']
  %s0 = inlined_call_operand.vmem [shape: f32[8,10], index: 0, kind: input, shape index: {}]
  %s1 = inlined_call_operand.vmem [shape: bf16[10,64], index: 1, kind: input, shape index: {}]
  %s2 = inlined_call_operand.vmem [shape: f32[1,64], index: 2, kind: input, shape index: {}]
  %s3 = inlined_call_operand.vmem [shape: bf16[64,4], index: 3, kind: input, shape index: {}]
  %s4 = inlined_call_operand.vmem [shape: f32[1,4], index: 4, kind: input, shape index: {}]
  %s5 = inlined_call_operand.vmem [shape: f32[8,4], index: 5, kind: output, shape index: {}]
  %s6 = sld [smem:[#allocation0]]
  $region30: #{tpu_custom_call.1} parent=0
    _
  %s8 = ssub.s32 1, %s6
  %s9 = scalar_select 0, %s8, %s6
  // Predicated region
  $region2: #{tpu_custom_call.1} parent=0 // pred_check
    _
  $region3: #{tpu_custom_call.1} parent=0 // pred_check_branch
    %11 = sbr.rel (0) target = $region5
  $region4: #{tpu_custom_call.1} parent=0 // pred_region
    _
  $region5: #{tpu_custom_call.1} parent=0 // pred_fallthru
    _
  // Predicated region
  $region6: #{tpu_custom_call.1} parent=0 // pred_check
    _
  $region7: #{tpu_custom_call.1} parent=0 // pred_check_branch
    %13 = sbr.rel (0) target = $region9
  $region8: #{tpu_custom_call.1} parent=0 // pred_region
    _
  $region9: #{tpu_custom_call.1} parent=0 // pred_fallthru
    _
  // Predicated region
  $region10: #{tpu_custom_call.1} parent=0 // pred_check
    _
  $region11: #{tpu_custom_call.1} parent=0 // pred_check_branch
    %15 = sbr.rel (0) target = $region13
  $region12: #{tpu_custom_call.1} parent=0 // pred_region
    _
  $region13: #{tpu_custom_call.1} parent=0 // pred_fallthru
    _
  // Predicated region
  $region14: #{tpu_custom_call.1} parent=0 // pred_check
    _
  $region15: #{tpu_custom_call.1} parent=0 // pred_check_branch
    %17 = sbr.rel (0) target = $region17
  $region16: #{tpu_custom_call.1} parent=0 // pred_region
    _
  $region17: #{tpu_custom_call.1} parent=0 // pred_fallthru
    _
  // Predicated region
  $region18: #{tpu_custom_call.1} parent=0 // pred_check
    _
  $region19: #{tpu_custom_call.1} parent=0 // pred_check_branch
    %19 = sbr.rel (0) target = $region21
  $region20: #{tpu_custom_call.1} parent=0 // pred_region
    _
  $region21: #{tpu_custom_call.1} parent=0 // pred_fallthru
    _
  %v21 = vld [vmem:[%s0] sm:$0xff]
  %v22 = vpack.c.bf16 %v21, %v21
  %v23 = vld [vmem:[%s1] sm:$0xf]
  %v24 = vld [vmem:[%s1 + $0x4] sm:$0x1]
  %v25 = vld [vmem:[%s2] sm:$0x1]
  %v27 = vperm.slane %v25, 0
  %v31 = vunpack.c.l.b16 %v23
  %v32 = vunpack.c.l.b16 %v24
  %v33 = vpack.c.b16 %v32, %v31
  %vm34 = vcmask 80896
  %v36 = vsel %vm34, %v22, 0
  %vm38 = vcmask 1044480
  %v40 = vsel %vm38, %v33, 0
  %42 = vmatpush.bf16.msra.mxu0 0
  %43 = vmatpush.bf16.msra.mxu0 0
  %44 = vmatpush.bf16.msra.mxu0 0
  %45 = vmatpush.bf16.msra.mxu0 0
  %46 = vmatpush.bf16.msra.mxu0 0
  %47 = vmatpush.bf16.msra.mxu0 0
  %48 = vmatpush.bf16.msra.mxu0 0
  %49 = vmatpush.bf16.msra.mxu0 %v40
  %50 = vmatmul.bf16.gmra.mxu0 %v36
  %v51 = vpop.f32.mrf.mxu0
  %v52 = vadd.f32 %v27, %v51
  %v53 = vpop.f32.mrf.mxu0
  %54 = vdwg.mxu0
  %v55 = vmax.f32 %v52, 0.0
  %v56 = vpack.c.bf16 %v55, %v55
  %v57 = vld [vmem:[%s3] sm:$0xf]
  %v58 = vld [vmem:[%s3 + $0x4] sm:$0xf]
  %v59 = vld [vmem:[%s3 + $0x8] sm:$0xf]
  %v60 = vld [vmem:[%s3 + $0xc] sm:$0xf]
  %v61 = vld [vmem:[%s3 + $0x10] sm:$0xf]
  %v62 = vld [vmem:[%s3 + $0x14] sm:$0xf]
  %v63 = vld [vmem:[%s3 + $0x18] sm:$0xf]
  %v64 = vld [vmem:[%s3 + $0x1c] sm:$0xf]
  %v65 = vld [vmem:[%s4] sm:$0x1]
  %v67 = vperm.slane %v65, 0
  %v77 = vunpack.c.l.b16 %v57
  %v78 = vunpack.c.l.b16 %v58
  %v79 = vunpack.c.l.b16 %v59
  %v80 = vunpack.c.l.b16 %v60
  %v81 = vunpack.c.l.b16 %v61
  %v82 = vunpack.c.l.b16 %v62
  %v83 = vunpack.c.l.b16 %v63
  %v84 = vunpack.c.l.b16 %v64
  %v85 = vpack.c.b16 %v78, %v77
  %v86 = vpack.c.b16 %v80, %v79
  %v87 = vpack.c.b16 %v82, %v81
  %v88 = vpack.c.b16 %v84, %v83
  %vm93 = vcmask 523264
  %v95 = vsel %vm93, %v56, 0
  %97 = vmatpush.bf16.msra.mxu0 0
  %98 = vmatpush.bf16.msra.mxu0 0
  %99 = vmatpush.bf16.msra.mxu0 0
  %100 = vmatpush.bf16.msra.mxu0 0
  %101 = vmatpush.bf16.msra.mxu0 %v88
  %102 = vmatpush.bf16.msra.mxu0 %v87
  %103 = vmatpush.bf16.msra.mxu0 %v86
  %104 = vmatpush.bf16.msra.mxu0 %v85
  %105 = vmatmul.bf16.gmra.mxu0 %v95
  %v106 = vpop.f32.mrf.mxu0
  %v107 = vadd.f32 %v67, %v106
  %v108 = vpop.f32.mrf.mxu0
  %109 = vdwg.mxu0
  %vm110 = vcmask 31744
  %111 = vst.msk [vmem:[%s5] sm:$0xff] %vm110, %v107
  // Predicated region
  $region22: #{tpu_custom_call.1} parent=0 // pred_check
    _
  $region23: #{tpu_custom_call.1} parent=0 // pred_check_branch
    %113 = sbr.rel (0) target = $region25
  $region24: #{tpu_custom_call.1} parent=0 // pred_region
    _
  $region25: #{tpu_custom_call.1} parent=0 // pred_fallthru
    _
  // Predicated region
  $region26: #{tpu_custom_call.1} parent=0 // pred_check
    _
  $region27: #{tpu_custom_call.1} parent=0 // pred_check_branch
    %115 = sbr.rel (0) target = $region29
  $region28: #{tpu_custom_call.1} parent=0 // pred_region
    _
  $region29: #{tpu_custom_call.1} parent=0 // pred_fallthru
    _

</llo_original>
